<compile_context>
chip_gen: v7x
topology: tpu7x:2x2x1
jax: 0.10.0
libtpu: 0.0.40
codegen_flags: <defaults>
</compile_context>

<pallas_src>
import math

import numpy as np
import jax
import jax.numpy as jnp
from jax import lax
from jax.experimental import pallas as pl
from jax.experimental.pallas import tpu as pltpu

_LANE = 128
_MIN_PALLAS_BYTES = 1 << 20        # below this, XLA slices win (fixed call overhead)
_MAX_PALLAS_SPLITS = 32            # cap on per-step output DMA chains / buffers
_TARGET_BLOCK_BYTES = 4 << 20      # ~4 MiB input block per grid step
_CAP_BLOCK_BYTES = 8 << 20         # never let one un-tileable row exceed this
_VMEM_BUDGET = 40 << 20            # padded, double-buffered estimate must fit here
_VMEM_LIMIT_CAP = 48 << 20         # never ask Mosaic for more than this
_VMEM_DEFAULT_SAFE = 14 << 20      # below this, keep the default scoped limit (v5e)


def _sublane(itemsize):
    # f32 -> 8, bf16/f16 -> 16, int8/fp8 -> 32 sublane packing.
    return max(8, 32 // itemsize)


def _round_up(v, m):
    return ((v + m - 1) // m) * m


def _padded_block_bytes(block_shape, itemsize):
    """VMEM bytes of one buffer of `block_shape` after (sublane, lane) tile padding."""
    if len(block_shape) == 1:
        return _round_up(block_shape[-1], _LANE) * itemsize
    sub = _round_up(block_shape[-2], _sublane(itemsize))
    lane = _round_up(block_shape[-1], _LANE)
    lead = int(math.prod(block_shape[:-2])) if len(block_shape) > 2 else 1
    return lead * sub * lane * itemsize


def _vmem_limit(vmem_estimate):
    if vmem_estimate <= _VMEM_DEFAULT_SAFE:
        return None
    return int(min(_VMEM_LIMIT_CAP, vmem_estimate))


def _choose_lead_block(lead, row_bytes, sub):
    """Pick a sublane-tile-aligned block of lead rows moving ~TARGET bytes."""
    lead_blk = max(1, _TARGET_BLOCK_BYTES // max(1, row_bytes))
    if lead_blk >= lead or lead <= sub:
        return lead
    lead_blk = max(sub, (lead_blk // sub) * sub)
    return min(lead_blk, lead)


def _split_for_megacore(lead, lead_blk, total_bytes, sub):
    """Avoid a single-step grid for mid/large arrays so both v7x cores get work."""
    if lead_blk >= lead and total_bytes >= (2 << 20) and lead >= 2 * sub:
        half = _round_up(-(-lead // 2), sub)
        if half < lead:
            return half
    return lead_blk


def _make_kernel_2d(sections, trail):
    """Collapsed view: each chunk is a lane-aligned slice of the lane axis."""

    def kernel(x_ref, *out_refs):
        # x_ref: (lead_blk, dim_size*trail); out_refs[j]: (lead_blk, size_j*trail)
        for (off, size), o_ref in zip(sections, out_refs):
            o_ref[...] = x_ref[:, off * trail:(off + size) * trail]

    return kernel


def _make_kernel_3d(sections, squeeze):
    """Canonical 3-D view; squeeze outputs are written as dense 2-D blocks."""

    def kernel(x_ref, *out_refs):
        # x_ref: (lead_blk, dim_size, trail_blk)
        for (off, size), o_ref in zip(sections, out_refs):
            if squeeze:
                o_ref[...] = x_ref[:, off, :]                 # (lead_blk, trail_blk)
            else:
                o_ref[...] = x_ref[:, off:off + size, :]      # (lead_blk, size, trail_blk)

    return kernel


def list_from_dim(x, dim, split_size_or_sections=1, check_length=None,
                  *, min_pallas_bytes=_MIN_PALLAS_BYTES):
    """Pallas implementation of ListFromDim.forward."""
    ndim = x.ndim
    dim = dim % ndim
    dim_size = x.shape[dim]
    itemsize = x.dtype.itemsize
    sub = _sublane(itemsize)

    squeeze = isinstance(split_size_or_sections, int) and split_size_or_sections == 1

    # Static chunk sizes along `dim` (torch.split semantics: ragged last chunk
    # and explicit list-of-sections both supported).
    if isinstance(split_size_or_sections, int):
        s = int(split_size_or_sections)
        sizes = [s] * (dim_size // s)
        if dim_size % s:
            sizes.append(dim_size % s)
    else:
        sizes = [int(v) for v in split_size_or_sections]
        if sum(sizes) != dim_size:
            raise ValueError(f"sections {sizes} do not sum to dim size {dim_size}")

    num_splits = len(sizes)
    # NB: matches the torch module (`if self.check_length and ...`), so
    # check_length in (None, 0) skips the check.
    if check_length and num_splits != check_length:
        raise ValueError(
            f"For shape: {x.shape}, splits: {split_size_or_sections}. "
            f"Expected len={check_length} but len={num_splits}!")

    offsets, acc = [], 0
    for sz in sizes:
        offsets.append(acc)
        acc += sz
    sections = list(zip(offsets, sizes))

    def chunk_shape(size):
        if squeeze:
            return tuple(s for a, s in enumerate(x.shape) if a != dim)
        return tuple(size if a == dim else s for a, s in enumerate(x.shape))

    lead = int(math.prod(x.shape[:dim]))
    trail = int(math.prod(x.shape[dim + 1:]))
    total_bytes = int(x.size) * itemsize

    def xla_split():
        outs = []
        for off, size in sections:
            c = lax.slice_in_dim(x, off, off + size, axis=dim)
            outs.append(c.reshape(chunk_shape(size)))
        return outs

    # --- Trivial / fast paths -------------------------------------------------
    if num_splits == 1:
        return [x.reshape(chunk_shape(sizes[0]))]
    if lead == 1:
        # Each chunk is already a contiguous slab of x; XLA slices are free passes.
        return xla_split()
    if total_bytes < min_pallas_bytes or num_splits > _MAX_PALLAS_SPLITS:
        # Tiny tensors / very wide splits: fixed pallas_call + per-output DMA
        # chain overhead dominates, XLA slices already hit the HBM roofline.
        return xla_split()

    cost = pl.CostEstimate(flops=0, transcendentals=0, bytes_accessed=2 * total_bytes)

    # --- Preferred Pallas path: collapsed 2-D view, lane-aligned slices -------
    lane_aligned = all((off * trail) % _LANE == 0 and (size * trail) % _LANE == 0
                       for off, size in sections)
    row_bytes = dim_size * trail * itemsize   # one lead-row of x

    if lane_aligned and row_bytes <= _CAP_BLOCK_BYTES:
        lead_blk = _choose_lead_block(lead, row_bytes, sub)
        lead_blk = _split_for_megacore(lead, lead_blk, total_bytes, sub)
        in_block = (lead_blk, dim_size * trail)
        out_blocks = [(lead_blk, size * trail) for size in sizes]
        vmem_est = (2 * _padded_block_bytes(in_block, itemsize)
                    + 2 * sum(_padded_block_bytes(b, itemsize) for b in out_blocks)
                    + (2 << 20))
        if vmem_est <= _VMEM_BUDGET:
            x2 = x.reshape(lead, dim_size * trail)             # free contiguous reshape
            grid = (pl.cdiv(lead, lead_blk),)
            outs = pl.pallas_call(
                _make_kernel_2d(sections, trail),
                out_shape=tuple(jax.ShapeDtypeStruct((lead, size * trail), x.dtype)
                                for size in sizes),
                grid_spec=pltpu.PrefetchScalarGridSpec(
                    num_scalar_prefetch=0,
                    grid=grid,
                    in_specs=[pl.BlockSpec(in_block, lambda i: (i, 0))],
                    out_specs=[pl.BlockSpec(b, lambda i: (i, 0)) for b in out_blocks],
                ),
                compiler_params=pltpu.CompilerParams(
                    dimension_semantics=("parallel",),
                    vmem_limit_bytes=_vmem_limit(vmem_est),
                ),
                cost_estimate=cost,
            )(x2)
            return [o.reshape(chunk_shape(size)) for o, size in zip(outs, sizes)]

    # --- Fallback Pallas path: 3-D view (lane-dense trail, unaligned sections) -
    if trail >= _LANE:
        if row_bytes <= _CAP_BLOCK_BYTES:
            trail_blk = trail
            lead_blk = _choose_lead_block(lead, row_bytes, sub)
            lead_blk = _split_for_megacore(lead, lead_blk, total_bytes, sub)
        else:
            # A single lead-row is too large: tile the trail (lane) axis in
            # 128-lane multiples and keep the lead block minimal.
            lead_blk = lead if lead <= sub else sub
            col_bytes = lead_blk * dim_size * itemsize
            trail_blk = max(1, _TARGET_BLOCK_BYTES // col_bytes)
            trail_blk = min(trail, max(_LANE, (trail_blk // _LANE) * _LANE))

        in_block = (lead_blk, dim_size, trail_blk)
        if squeeze:
            out_blocks = [(lead_blk, trail_blk)] * num_splits
        else:
            out_blocks = [(lead_blk, size, trail_blk) for size in sizes]
        vmem_est = (2 * _padded_block_bytes(in_block, itemsize)
                    + 2 * sum(_padded_block_bytes(b, itemsize) for b in out_blocks)
                    + (2 << 20))
        if vmem_est <= _VMEM_BUDGET:
            x3 = x.reshape(lead, dim_size, trail)
            grid = (pl.cdiv(lead, lead_blk), pl.cdiv(trail, trail_blk))
            if squeeze:
                out_specs = [pl.BlockSpec((lead_blk, trail_blk), lambda i, t: (i, t))
                             for _ in sizes]
                out_shapes = tuple(jax.ShapeDtypeStruct((lead, trail), x.dtype)
                                   for _ in sizes)
            else:
                out_specs = [pl.BlockSpec((lead_blk, size, trail_blk),
                                          lambda i, t: (i, 0, t)) for size in sizes]
                out_shapes = tuple(jax.ShapeDtypeStruct((lead, size, trail), x.dtype)
                                   for size in sizes)
            outs = pl.pallas_call(
                _make_kernel_3d(sections, squeeze),
                out_shape=out_shapes,
                grid_spec=pltpu.PrefetchScalarGridSpec(
                    num_scalar_prefetch=0,
                    grid=grid,
                    in_specs=[pl.BlockSpec(in_block, lambda i, t: (i, 0, t))],
                    out_specs=out_specs,
                ),
                compiler_params=pltpu.CompilerParams(
                    dimension_semantics=("parallel", "parallel"),
                    vmem_limit_bytes=_vmem_limit(vmem_est),
                ),
                cost_estimate=cost,
            )(x3)
            return [o.reshape(chunk_shape(size)) for o, size in zip(outs, sizes)]

    # Lane-poor / VMEM-unfriendly cases: XLA slices (correct, roofline for copies).
    return xla_split()


if __name__ == "__main__":
    key = jax.random.PRNGKey(0)

    def check(outs, refs):
        assert len(outs) == len(refs)
        for o, r in zip(outs, refs):
            assert o.shape == r.shape and o.dtype == r.dtype
            np.testing.assert_allclose(np.asarray(o), np.asarray(r))

    # Small canonical shape from the module spec (NCHW, batch=2, channels=4, 16x16).
    x = jax.random.normal(key, (2, 4, 16, 16), dtype=jnp.float32)

    # Case 1: dim=1, split=1 (squeeze), check_length=4 — Pallas collapsed 2-D path.
    out1 = list_from_dim(x, dim=1, split_size_or_sections=1, check_length=4,
                         min_pallas_bytes=0)
    jax.block_until_ready(out1)
    check(out1, [jnp.squeeze(c, axis=1) for c in jnp.split(x, 4, axis=1)])

    # Case 2: dim=1, split=2 (no squeeze), check_length=2 — Pallas collapsed 2-D path.
    out2 = list_from_dim(x, dim=1, split_size_or_sections=2, check_length=2,
                         min_pallas_bytes=0)
    jax.block_until_ready(out2)
    check(out2, list(jnp.split(x, 2, axis=1)))

    # Case 3: dim=0, split=1 — contiguous fast path (no Pallas call).
    out3 = list_from_dim(x, dim=0, split_size_or_sections=1, check_length=2)
    jax.block_until_ready(out3)
    check(out3, [jnp.squeeze(c, axis=0) for c in jnp.split(x, 2, axis=0)])

    # Case 4: dim=-1, split=8 — lane-poor last-axis split, small tensor → XLA fallback.
    out4 = list_from_dim(x, dim=-1, split_size_or_sections=8, check_length=2)
    jax.block_until_ready(out4)
    check(out4, list(jnp.split(x, 2, axis=-1)))

    # Case 5: trail not a multiple of 128 → Pallas 3-D path with 2-D squeeze outputs.
    x5 = jax.random.normal(key, (4, 6, 8, 20), dtype=jnp.float32)
    out5 = list_from_dim(x5, dim=1, split_size_or_sections=1, check_length=6,
                         min_pallas_bytes=0)
    jax.block_until_ready(out5)
    check(out5, [jnp.squeeze(c, axis=1) for c in jnp.split(x5, 6, axis=1)])

    # Case 6: larger input (8 MiB) → default thresholds, multi-step parallel grid.
    x6 = jax.random.normal(key, (16, 8, 128, 128), dtype=jnp.float32)
    out6 = list_from_dim(x6, dim=1, split_size_or_sections=4, check_length=2)
    jax.block_until_ready(out6)
    check(out6, list(jnp.split(x6, 2, axis=1)))

    print("KERNEL_OK")
</pallas_src>

<mosaic_0001>
module attributes {stable_mosaic.version = 11 : i64} {
  func.func @kernel(%arg0: i32, %arg1: memref<2x1024xf32, #tpu.memory_space<vmem>>, %arg2: memref<2x256xf32, #tpu.memory_space<vmem>>, %arg3: memref<2x256xf32, #tpu.memory_space<vmem>>, %arg4: memref<2x256xf32, #tpu.memory_space<vmem>>, %arg5: memref<2x256xf32, #tpu.memory_space<vmem>>) attributes {dimension_semantics = [#tpu.dimension_semantics<parallel>], iteration_bounds = array<i64: 1>, scalar_prefetch = 0 : i64, scratch_operands = 0 : i64, tpu.core_type = #tpu.core_type<tc>, window_params = [{transform_indices = @transform_0, window_bounds = array<i64: 2, 1024>}, {transform_indices = @transform_1, window_bounds = array<i64: 2, 256>}, {transform_indices = @transform_2, window_bounds = array<i64: 2, 256>}, {transform_indices = @transform_3, window_bounds = array<i64: 2, 256>}, {transform_indices = @transform_4, window_bounds = array<i64: 2, 256>}]} {
    %c0 = arith.constant 0 : index
    %c0_0 = arith.constant 0 : index
    %0 = vector.load %arg1[%c0, %c0_0] : memref<2x1024xf32, #tpu.memory_space<vmem>>, vector<2x256xf32>
    %c0_1 = arith.constant 0 : index
    %c0_2 = arith.constant 0 : index
    %1 = vector.load %arg2[%c0_1, %c0_2] : memref<2x256xf32, #tpu.memory_space<vmem>>, vector<2x256xf32>
    tpu.vector_store %arg2[%c0_1, %c0_2], %0 {strides = array<i32>} : memref<2x256xf32, #tpu.memory_space<vmem>>, vector<2x256xf32>,
    %c0_3 = arith.constant 0 : index
    %c256 = arith.constant 256 : index
    %2 = vector.load %arg1[%c0_3, %c256] : memref<2x1024xf32, #tpu.memory_space<vmem>>, vector<2x256xf32>
    %c0_4 = arith.constant 0 : index
    %c0_5 = arith.constant 0 : index
    %3 = vector.load %arg3[%c0_4, %c0_5] : memref<2x256xf32, #tpu.memory_space<vmem>>, vector<2x256xf32>
    tpu.vector_store %arg3[%c0_4, %c0_5], %2 {strides = array<i32>} : memref<2x256xf32, #tpu.memory_space<vmem>>, vector<2x256xf32>,
    %c0_6 = arith.constant 0 : index
    %c512 = arith.constant 512 : index
    %4 = vector.load %arg1[%c0_6, %c512] : memref<2x1024xf32, #tpu.memory_space<vmem>>, vector<2x256xf32>
    %c0_7 = arith.constant 0 : index
    %c0_8 = arith.constant 0 : index
    %5 = vector.load %arg4[%c0_7, %c0_8] : memref<2x256xf32, #tpu.memory_space<vmem>>, vector<2x256xf32>
    tpu.vector_store %arg4[%c0_7, %c0_8], %4 {strides = array<i32>} : memref<2x256xf32, #tpu.memory_space<vmem>>, vector<2x256xf32>,
    %c0_9 = arith.constant 0 : index
    %c768 = arith.constant 768 : index
    %6 = vector.load %arg1[%c0_9, %c768] : memref<2x1024xf32, #tpu.memory_space<vmem>>, vector<2x256xf32>
    %c0_10 = arith.constant 0 : index
    %c0_11 = arith.constant 0 : index
    %7 = vector.load %arg5[%c0_10, %c0_11] : memref<2x256xf32, #tpu.memory_space<vmem>>, vector<2x256xf32>
    tpu.vector_store %arg5[%c0_10, %c0_11], %6 {strides = array<i32>} : memref<2x256xf32, #tpu.memory_space<vmem>>, vector<2x256xf32>,
    return
  }
  func.func @transform_0(%arg0: i32) -> (i32, i32) {
    %c0_i32 = arith.constant 0 : i32
    %c0_i32_0 = arith.constant 0 : i32
    return %arg0, %c0_i32 : i32, i32
  }
  func.func @transform_1(%arg0: i32) -> (i32, i32) {
    %c0_i32 = arith.constant 0 : i32
    %c0_i32_0 = arith.constant 0 : i32
    return %arg0, %c0_i32 : i32, i32
  }
  func.func @transform_2(%arg0: i32) -> (i32, i32) {
    %c0_i32 = arith.constant 0 : i32
    %c0_i32_0 = arith.constant 0 : i32
    return %arg0, %c0_i32 : i32, i32
  }
  func.func @transform_3(%arg0: i32) -> (i32, i32) {
    %c0_i32 = arith.constant 0 : i32
    %c0_i32_0 = arith.constant 0 : i32
    return %arg0, %c0_i32 : i32, i32
  }
  func.func @transform_4(%arg0: i32) -> (i32, i32) {
    %c0_i32 = arith.constant 0 : i32
    %c0_i32_0 = arith.constant 0 : i32
    return %arg0, %c0_i32 : i32, i32
  }
}

</mosaic_0001>

<llo_original>
// kernel: tpu_custom_call.1
$region0: #{tpu_custom_call.1}
  #allocation0 [shape = 'u32[]', space=smem, size = 0x4, offset = 0x4, fixed_abs, tag = 'smem constant byte address 0x4 - core index']
  #allocation1 [shape = 'u32[144,128]{1,0:T(1,128)}', space=vmem, size = 0x12000, scoped, tag = 'internal scratch']
  %s0 = inlined_call_operand.hbm [shape: f32[2,1024], index: 0, kind: input, shape index: {}]
  %s1 = inlined_call_operand.hbm [shape: f32[2,256], index: 1, kind: output, shape index: {0}]
  %s2 = inlined_call_operand.hbm [shape: f32[2,256], index: 2, kind: output, shape index: {1}]
  %s3 = inlined_call_operand.hbm [shape: f32[2,256], index: 3, kind: output, shape index: {2}]
  %s4 = inlined_call_operand.hbm [shape: f32[2,256], index: 4, kind: output, shape index: {3}]
  %5 = xla_tuple %s1, %s2, %s3, %s4
  %s6 = sld [smem:[#allocation0]]
  $region42: #{tpu_custom_call.1} parent=0
    _
  %s8 = ssub.s32 1, %s6
  %s9 = scalar_select 0, %s8, %s6
  $region1: #{tpu_custom_call.1} parent=0
    #allocation2 [shape = 'u8[8192]{0}', space=vmem, size = 0x2000, scoped, tag = 'input window, operand 0, single buffered']
    #allocation3 [shape = 's32[1]{0}', space=sflag, size = 0x4, scoped, tag = 'scoped memory for tpu_custom_call.1']
    #allocation4 [shape = 's32[1]{0}', space=sflag, size = 0x4, scoped, tag = 'scoped memory for tpu_custom_call.1']
    #allocation5 [shape = 'u8[2048]{0}', space=vmem, size = 0x800, scoped, tag = 'output window, operand 0, single buffered']
    #allocation6 [shape = 'u8[2048]{0}', space=vmem, size = 0x800, scoped, tag = 'output window, operand 1, single buffered']
    #allocation7 [shape = 's32[1]{0}', space=sflag, size = 0x4, scoped, tag = 'scoped memory for tpu_custom_call.1']
    #allocation8 [shape = 'u8[2048]{0}', space=vmem, size = 0x800, scoped, tag = 'output window, operand 2, single buffered']
    #allocation9 [shape = 'u8[2048]{0}', space=vmem, size = 0x800, scoped, tag = 'output window, operand 3, single buffered']
    #allocation10 [shape = 's32[1]{0}', space=sflag, size = 0x4, scoped, tag = 'scoped memory for tpu_custom_call.1']
    %10 = vsyncpa [#allocation3], 0
    %11 = vsyncpa [#allocation4], 0
    %12 = vsyncpa [#allocation7], 0
    %13 = vsyncpa [#allocation10], 0
    // Predicated region
    $region2: #{tpu_custom_call.1} parent=1 // pred_check
      _
    $region3: #{tpu_custom_call.1} parent=1 // pred_check_branch
      %15 = sbr.rel (0) target = $region5
    $region4: #{tpu_custom_call.1} parent=1 // pred_region
      %s17 = ssub.s32 256, 256
      %18 = vsyncadd [#allocation3], %s17
      %s20 = sshll.u32 [#allocation2], 4
      %s21 = int_to_ptr.vmem [resolvable:$true] %s20
      %23 = dma.hbm_to_vmem [thread:$0]  %s0, 256, %s21, [#allocation3]
    $region5: #{tpu_custom_call.1} parent=1 // pred_fallthru
      _
    // Predicated region
    $region6: #{tpu_custom_call.1} parent=1 // pred_check
      _
    $region7: #{tpu_custom_call.1} parent=1 // pred_check_branch
      %25 = sbr.rel (0) target = $region9
    $region8: #{tpu_custom_call.1} parent=1 // pred_region
      %26 = dma.done [#allocation3], 256
    $region9: #{tpu_custom_call.1} parent=1 // pred_fallthru
      _
    %v27 = vld [vmem:[#allocation2] sm:$0xf]
    %28 = vst [vmem:[#allocation5] sm:$0xf] %v27
    %v29 = vld [vmem:[#allocation2 + $0x4] sm:$0xf]
    %30 = vst [vmem:[#allocation6] sm:$0xf] %v29
    %v31 = vld [vmem:[#allocation2 + $0x8] sm:$0xf]
    %32 = vst [vmem:[#allocation8] sm:$0xf] %v31
    %v33 = vld [vmem:[#allocation2 + $0xc] sm:$0xf]
    %34 = vst [vmem:[#allocation9] sm:$0xf] %v33
    // Predicated region
    $region10: #{tpu_custom_call.1} parent=1 // pred_check
      _
    $region11: #{tpu_custom_call.1} parent=1 // pred_check_branch
      %36 = sbr.rel (0) target = $region13
    $region12: #{tpu_custom_call.1} parent=1 // pred_region
      %s38 = ssub.s32 64, 64
      %39 = vsyncadd [#allocation4], %s38
      %s41 = sshll.u32 [#allocation5], 4
      %s42 = int_to_ptr.vmem [resolvable:$true] %s41
      %44 = dma.vmem_to_hbm [thread:$0]  %s42, 64, %s1, [#allocation4]
    $region13: #{tpu_custom_call.1} parent=1 // pred_fallthru
      _
    // Predicated region
    $region14: #{tpu_custom_call.1} parent=1 // pred_check
      _
    $region15: #{tpu_custom_call.1} parent=1 // pred_check_branch
      %46 = sbr.rel (0) target = $region17
    $region16: #{tpu_custom_call.1} parent=1 // pred_region
      %s48 = ssub.s32 64, 64
      %49 = vsyncadd [#allocation7], %s48
      %s51 = sshll.u32 [#allocation6], 4
      %s52 = int_to_ptr.vmem [resolvable:$true] %s51
      %54 = dma.vmem_to_hbm [thread:$0]  %s52, 64, %s2, [#allocation7]
    $region17: #{tpu_custom_call.1} parent=1 // pred_fallthru
      _
    // Predicated region
    $region18: #{tpu_custom_call.1} parent=1 // pred_check
      _
    $region19: #{tpu_custom_call.1} parent=1 // pred_check_branch
      %56 = sbr.rel (0) target = $region21
    $region20: #{tpu_custom_call.1} parent=1 // pred_region
      %s58 = ssub.s32 64, 64
      %59 = vsyncadd [#allocation7], %s58
      %s61 = sshll.u32 [#allocation8], 4
      %s62 = int_to_ptr.vmem [resolvable:$true] %s61
      %64 = dma.vmem_to_hbm [thread:$0]  %s62, 64, %s3, [#allocation7]
    $region21: #{tpu_custom_call.1} parent=1 // pred_fallthru
      _
    // Predicated region
    $region22: #{tpu_custom_call.1} parent=1 // pred_check
      _
    $region23: #{tpu_custom_call.1} parent=1 // pred_check_branch
      %66 = sbr.rel (0) target = $region25
    $region24: #{tpu_custom_call.1} parent=1 // pred_region
      %s68 = ssub.s32 64, 64
      %69 = vsyncadd [#allocation10], %s68
      %s71 = sshll.u32 [#allocation9], 4
      %s72 = int_to_ptr.vmem [resolvable:$true] %s71
      %74 = dma.vmem_to_hbm [thread:$0]  %s72, 64, %s4, [#allocation10]
    $region25: #{tpu_custom_call.1} parent=1 // pred_fallthru
      _
    // Predicated region
    $region26: #{tpu_custom_call.1} parent=1 // pred_check
      _
    $region27: #{tpu_custom_call.1} parent=1 // pred_check_branch
      %76 = sbr.rel (0) target = $region29
    $region28: #{tpu_custom_call.1} parent=1 // pred_region
      %77 = dma.done [#allocation4], 64
    $region29: #{tpu_custom_call.1} parent=1 // pred_fallthru
      _
    // Predicated region
    $region30: #{tpu_custom_call.1} parent=1 // pred_check
      _
    $region31: #{tpu_custom_call.1} parent=1 // pred_check_branch
      %79 = sbr.rel (0) target = $region33
    $region32: #{tpu_custom_call.1} parent=1 // pred_region
      %80 = dma.done [#allocation7], 64
    $region33: #{tpu_custom_call.1} parent=1 // pred_fallthru
      _
    // Predicated region
    $region34: #{tpu_custom_call.1} parent=1 // pred_check
      _
    $region35: #{tpu_custom_call.1} parent=1 // pred_check_branch
      %82 = sbr.rel (0) target = $region37
    $region36: #{tpu_custom_call.1} parent=1 // pred_region
      %83 = dma.done [#allocation7], 64
    $region37: #{tpu_custom_call.1} parent=1 // pred_fallthru
      _
    // Predicated region
    $region38: #{tpu_custom_call.1} parent=1 // pred_check
      _
    $region39: #{tpu_custom_call.1} parent=1 // pred_check_branch
      %85 = sbr.rel (0) target = $region41
    $region40: #{tpu_custom_call.1} parent=1 // pred_region
      %86 = dma.done [#allocation10], 64
    $region41: #{tpu_custom_call.1} parent=1 // pred_fallthru
      _
    %87 = vsyncpa [#allocation3], 1
    %88 = vsyncpa [#allocation4], 1
    %89 = vsyncpa [#allocation7], 1
    %90 = vsyncpa [#allocation10], 1

</llo_original>
